<compile_context>
chip_gen: v7x
topology: tpu7x:2x2x1
jax: 0.10.0
libtpu: 0.0.40
codegen_flags: <defaults>
</compile_context>

<pallas_src>
import functools
from math import exp

import numpy as np
import jax
import jax.numpy as jnp
from jax.experimental import pallas as pl
from jax.experimental.pallas import tpu as pltpu

WINDOW_SIZE = 11
SIGMA = 1.5
_C1 = 0.01 ** 2
_C2 = 0.03 ** 2
_LANES = 128
_TARGET_TILE_ROWS = 2048      # ~1 MiB per f32 input buffer per grid step


# ---------------------------------------------------------------------------
# small host-side helpers
# ---------------------------------------------------------------------------
def _cdiv(a, b):
    return -(-a // b)


def _round_up(a, m):
    return -(-a // m) * m


def _tile_rows(rows, g):
    """Rows per grid step for a (rows, 128) tensor split over g steps."""
    tr = _round_up(_cdiv(rows, g), 8)
    return min(tr, rows)


def _scoped_vmem_limit():
    """Generation-aware scoped-VMEM limit: ~48 MiB on v7x (64 MiB physical),
    ~96 MiB on v5e/v6e (128 MiB physical)."""
    try:
        cap = int(pltpu.get_tpu_info().vmem_capacity_bytes)
    except Exception:                                   # pragma: no cover
        cap = 128 * 1024 * 1024
    return max(32 * 1024 * 1024, min(int(cap * 3 // 4), 100 * 1024 * 1024))


# ---------------------------------------------------------------------------
# Gaussian window / banded conv matrices (host-side constants)
# ---------------------------------------------------------------------------
def _gaussian_1d(window_size=WINDOW_SIZE, sigma=SIGMA):
    g = np.array(
        [exp(-((x - window_size // 2) ** 2) / float(2 * sigma ** 2))
         for x in range(window_size)],
        dtype=np.float64,
    )
    return (g / g.sum()).astype(np.float32)


@functools.lru_cache(maxsize=None)
def _banded_conv_matrices(h, w, window_size=WINDOW_SIZE, sigma=SIGMA):
    """Banded matrices so that the zero-padded separable gaussian conv of an
    (h, w) plane is   conv(x) = Kh @ (x @ Kw)   (padding folded in).
    The band matrices are symmetric (symmetric gaussian window)."""
    g = _gaussian_1d(window_size, sigma)
    pad = window_size // 2

    def band(n):
        m = np.zeros((n, n), np.float32)
        for out in range(n):
            for k in range(window_size):
                src = out + k - pad
                if 0 <= src < n:
                    m[src, out] += g[k]
        return m

    kw = band(w)          # (w, w):  y = x @ kw   (width conv)
    kh = band(h).T        # (h, h):  z = kh @ y   (height conv)  (== band(h))
    return kh, kw


# ---------------------------------------------------------------------------
# Layout helpers (lane-dense packing for the fused scalar kernel)
# ---------------------------------------------------------------------------
def _to_lanes(x):
    """Flatten to f32 and reshape to (rows, 128).  The tail pad to a multiple
    of 128 is only materialized when actually needed (lane-aligned inputs,
    the common case for real image sizes, are a copy-free reshape)."""
    flat = jnp.reshape(x, (-1,)).astype(jnp.float32)
    n = flat.shape[0]
    rows = _cdiv(n, _LANES)
    padded = rows * _LANES
    if padded != n:
        flat = jnp.concatenate([flat, jnp.zeros((padded - n,), jnp.float32)])
    return jnp.reshape(flat, (rows, _LANES)), n


def _prep_grad(grad):
    """(N, 3) -> (3, Npad) transposed; padded columns = (1,0,0) so that
    (norm - 1)^2 == 0 for padding."""
    g = jnp.transpose(grad.astype(jnp.float32))        # (3, N)
    n = g.shape[1]
    padded = _cdiv(n, _LANES) * _LANES
    if padded != n:
        fill = jnp.zeros((3, padded - n), jnp.float32).at[0, :].set(1.0)
        g = jnp.concatenate([g, fill], axis=1)
    return g, n


def _full_sum_2d(x):
    # two single-axis reductions -> (1, 1)
    return jnp.sum(jnp.sum(x, axis=1, keepdims=True), axis=0, keepdims=True)


# ---------------------------------------------------------------------------
# Fused scalar-loss kernel: 1-D grid over row tiles, resident accumulator
# ---------------------------------------------------------------------------
def _fused_scalar_kernel(rp_ref, rg_ref, pm_ref, om_ref, al_ref, hm_ref,
                         sd_ref, g_ref, o_ref, *,
                         tr_rgb, rows_rgb, tr_mask, rows_mask,
                         tr_alpha, rows_alpha,
                         inv_rgb, inv_mask, inv_alpha, inv_sdf, inv_eik):
    i = pl.program_id(0)

    def row_mask(shape, tr, rows):
        row = jax.lax.broadcasted_iota(jnp.int32, shape, 0) + i * tr
        return row < rows

    # rgb L1 / L2 (single read of both rgb tiles)
    d = rp_ref[...] - rg_ref[...]
    d = jnp.where(row_mask(d.shape, tr_rgb, rows_rgb), d, 0.0)
    s_l1 = _full_sum_2d(jnp.abs(d)) * inv_rgb
    s_l2 = _full_sum_2d(d * d) * inv_rgb

    # mask L1
    dm = pm_ref[...] - om_ref[...]
    dm = jnp.where(row_mask(dm.shape, tr_mask, rows_mask), dm, 0.0)
    s_mask = _full_sum_2d(jnp.abs(dm)) * inv_mask

    # head-mask (penalize only alpha > mask)
    a = al_ref[...]
    hmv = hm_ref[...]
    dh = a - hmv
    contrib = jnp.where(a > hmv, dh * dh, jnp.zeros_like(dh))
    contrib = jnp.where(row_mask(contrib.shape, tr_alpha, rows_alpha),
                        contrib, 0.0)
    s_head = _full_sum_2d(contrib) * inv_alpha

    lane = jax.lax.broadcasted_iota(jnp.int32, (1, _LANES), 1)
    step = (jnp.where(lane == 0, s_l1, 0.0)
            + jnp.where(lane == 1, s_l2, 0.0)
            + jnp.where(lane == 2, s_mask, 0.0)
            + jnp.where(lane == 3, s_head, 0.0))

    @pl.when(i == 0)
    def _():
        # tiny resident tensors: computed exactly once, at the first step
        sd = sd_ref[...]
        s_sdf = _full_sum_2d(sd * sd) * inv_sdf
        g = g_ref[...]
        nrm = jnp.sqrt(jnp.sum(g * g, axis=0, keepdims=True))     # (1, Npad)
        s_eik = jnp.sum((nrm - 1.0) ** 2, axis=1, keepdims=True) * inv_eik
        o_ref[...] = (step
                      + jnp.where(lane == 4, s_sdf, 0.0)
                      + jnp.where(lane == 5, s_eik, 0.0))

    @pl.when(i > 0)
    def _():
        o_ref[...] = o_ref[...] + step


def _tiled_spec(tr, nb):
    """Row-tiled BlockSpec with a clamped block index; steps past the last
    real block re-read it, and the in-kernel row mask zeroes their
    contribution."""
    last = nb - 1

    def idx(i):
        return (jnp.minimum(i, last), 0)

    return pl.BlockSpec((tr, _LANES), idx)


def _fused_scalar_losses(rgb_pred, rgb_gt, pred_mask, obj_mask,
                         gs_alpha, head_mask, sdf_values, grad_thetas):
    rp, n_rgb = _to_lanes(rgb_pred)
    rg, _ = _to_lanes(rgb_gt)
    pm, n_mask = _to_lanes(pred_mask)
    om, _ = _to_lanes(obj_mask)
    al, n_alpha = _to_lanes(gs_alpha)
    hm, _ = _to_lanes(head_mask)
    sd, n_sdf = _to_lanes(sdf_values)
    gt, n_eik = _prep_grad(grad_thetas)

    rows_rgb = rp.shape[0]
    rows_mask = pm.shape[0]
    rows_alpha = al.shape[0]

    g_steps = max(1,
                  _cdiv(rows_rgb, _TARGET_TILE_ROWS),
                  _cdiv(rows_mask, _TARGET_TILE_ROWS),
                  _cdiv(rows_alpha, _TARGET_TILE_ROWS))

    tr_rgb = _tile_rows(rows_rgb, g_steps)
    nb_rgb = _cdiv(rows_rgb, tr_rgb)
    tr_mask = _tile_rows(rows_mask, g_steps)
    nb_mask = _cdiv(rows_mask, tr_mask)
    tr_alpha = _tile_rows(rows_alpha, g_steps)
    nb_alpha = _cdiv(rows_alpha, tr_alpha)

    kernel = functools.partial(
        _fused_scalar_kernel,
        tr_rgb=tr_rgb, rows_rgb=rows_rgb,
        tr_mask=tr_mask, rows_mask=rows_mask,
        tr_alpha=tr_alpha, rows_alpha=rows_alpha,
        inv_rgb=1.0 / float(n_rgb), inv_mask=1.0 / float(n_mask),
        inv_alpha=1.0 / float(n_alpha), inv_sdf=1.0 / float(n_sdf),
        inv_eik=1.0 / float(n_eik))

    out = pl.pallas_call(
        kernel,
        out_shape=jax.ShapeDtypeStruct((1, _LANES), jnp.float32),
        grid=(g_steps,),
        in_specs=[
            _tiled_spec(tr_rgb, nb_rgb), _tiled_spec(tr_rgb, nb_rgb),
            _tiled_spec(tr_mask, nb_mask), _tiled_spec(tr_mask, nb_mask),
            _tiled_spec(tr_alpha, nb_alpha), _tiled_spec(tr_alpha, nb_alpha),
            pl.BlockSpec(sd.shape, lambda i: (0, 0)),      # resident (tiny)
            pl.BlockSpec(gt.shape, lambda i: (0, 0)),      # resident (tiny)
        ],
        out_specs=pl.BlockSpec((1, _LANES), lambda i: (0, 0)),
        compiler_params=pltpu.CompilerParams(
            dimension_semantics=("arbitrary",),
            vmem_limit_bytes=_scoped_vmem_limit(),
        ),
    )(rp, rg, pm, om, al, hm, sd, gt)

    return {'rgb_l1': out[0, 0], 'rgb_l2': out[0, 1], 'mask': out[0, 2],
            'head_mask': out[0, 3], 'sdf': out[0, 4], 'eikonal': out[0, 5]}


# ---------------------------------------------------------------------------
# DSSIM kernel: per-plane grid, banded-matrix gaussian convs on the MXU
# (manual bf16x3 matmuls + fused width conv + live-range-shortened epilogue)
# ---------------------------------------------------------------------------
def _split_bf16(x):
    """Split an f32 array into bf16 hi/lo parts (hi + lo ~= x)."""
    hi = x.astype(jnp.bfloat16)
    lo = (x - hi.astype(jnp.float32)).astype(jnp.bfloat16)
    return hi, lo


def _mm(a, b):
    return jnp.dot(a, b, preferred_element_type=jnp.float32)


def _dot_split_rhs(a, b_hi, b_lo):
    """~f32-accurate a @ b using 3 single-pass bf16 MXU matmuls (rhs pre-split)."""
    a_hi, a_lo = _split_bf16(a)
    return _mm(a_hi, b_hi) + _mm(a_lo, b_hi) + _mm(a_hi, b_lo)


def _dot_split_lhs(a_hi, a_lo, b):
    """~f32-accurate a @ b using 3 single-pass bf16 MXU matmuls (lhs pre-split)."""
    b_hi, b_lo = _split_bf16(b)
    return _mm(a_hi, b_hi) + _mm(a_lo, b_hi) + _mm(a_hi, b_lo)


def _dssim_plane_body(x1, x2, kh_hi, kh_lo, kw_hi, kw_lo, o_ref):
    h = x1.shape[0]

    # Fused width conv: stack the 5 planes along the sublane axis -> one
    # logical (5H, W) @ (W, W) banded matmul instead of five.
    stacked = jnp.concatenate([x1, x2, x1 * x1, x2 * x2, x1 * x2], axis=0)
    y = _dot_split_rhs(stacked, kw_hi, kw_lo)                      # (5H, W)

    def conv_h(block):                                             # kh @ block
        return _dot_split_lhs(kh_hi, kh_lo, block)

    mu1 = conv_h(y[0:h])
    mu2 = conv_h(y[h:2 * h])
    mu1_sq = mu1 * mu1
    mu2_sq = mu2 * mu2
    mu1_mu2 = mu1 * mu2
    num1 = 2.0 * mu1_mu2 + _C1            # mu1/mu2 can die here
    den1 = mu1_sq + mu2_sq + _C1
    # consume each sigma conv immediately to keep live ranges short
    sigma1_sq = conv_h(y[2 * h:3 * h]) - mu1_sq
    sigma2_sq = conv_h(y[3 * h:4 * h]) - mu2_sq
    den2 = sigma1_sq + sigma2_sq + _C2
    num2 = 2.0 * (conv_h(y[4 * h:5 * h]) - mu1_mu2) + _C2
    ssim_map = (num1 * num2) / (den1 * den2)
    s = _full_sum_2d(ssim_map)                          # (1, 1) per-plane sum
    o_ref[...] = jnp.broadcast_to(s, o_ref.shape)       # lane-dense (1, 128)


def _dssim_plane_kernel_square(x1_ref, x2_ref, kb_ref, o_ref):
    # H == W: the band matrix is symmetric -> one matrix for both directions.
    kb_hi, kb_lo = _split_bf16(kb_ref[...])
    _dssim_plane_body(x1_ref[...], x2_ref[...], kb_hi, kb_lo, kb_hi, kb_lo,
                      o_ref)


def _dssim_plane_kernel_rect(x1_ref, x2_ref, kh_ref, kw_ref, o_ref):
    kh_hi, kh_lo = _split_bf16(kh_ref[...])
    kw_hi, kw_lo = _split_bf16(kw_ref[...])
    _dssim_plane_body(x1_ref[...], x2_ref[...], kh_hi, kh_lo, kw_hi, kw_lo,
                      o_ref)


def _dssim_loss(pred_nchw, gt_nchw):
    B, C, H, W = pred_nchw.shape
    BC = B * C
    kh_np, kw_np = _banded_conv_matrices(H, W)
    x1 = pred_nchw.reshape(BC, H, W).astype(jnp.float32)
    x2 = gt_nchw.reshape(BC, H, W).astype(jnp.float32)

    common = dict(
        out_shape=jax.ShapeDtypeStruct((BC, 1, _LANES), jnp.float32),
        grid=(BC,),
        out_specs=pl.BlockSpec((None, 1, _LANES), lambda p: (p, 0, 0)),
        compiler_params=pltpu.CompilerParams(
            dimension_semantics=("parallel",),          # megacore sharding
            vmem_limit_bytes=_scoped_vmem_limit(),      # generation-aware
        ),
    )
    x_spec = pl.BlockSpec((None, H, W), lambda p: (p, 0, 0))

    if H == W:
        kb = jnp.asarray(kw_np)
        out = pl.pallas_call(
            _dssim_plane_kernel_square,
            in_specs=[x_spec, x_spec,
                      pl.BlockSpec((W, W), lambda p: (0, 0))],
            **common)(x1, x2, kb)
    else:
        kh = jnp.asarray(kh_np)
        kw = jnp.asarray(kw_np)
        out = pl.pallas_call(
            _dssim_plane_kernel_rect,
            in_specs=[x_spec, x_spec,
                      pl.BlockSpec((H, H), lambda p: (0, 0)),
                      pl.BlockSpec((W, W), lambda p: (0, 0))],
            **common)(x1, x2, kh, kw)

    plane_sums = out[:, 0, 0]                           # (BC,)
    # all planes equal size -> mean over batch of (1 - mean per image)
    return 1.0 - jnp.sum(plane_sums) / float(BC * H * W)


# ---------------------------------------------------------------------------
# Loss module (JAX port of Loss.forward)
# ---------------------------------------------------------------------------
class PallasLoss:
    def __init__(self, mask_weight=0.0, rgb_l1_weight=1.0, rgb_l2_weight=0.0,
                 head_mask_weight=0.0, rgb_dssim_weight=0.0,
                 sdf_consistency_weight=0.0, eikonal_weight=0.0,
                 anchor_deform_loss_weight=1.0, anchor_scale_loss_weight=0.0,
                 anchor_opacity_loss_weight=0.0,
                 texture_neural_uv_delta_loss_weight=0.0,
                 fine_rgb_reg_loss_weight=0.0):
        self.mask_weight = mask_weight
        self.rgb_l1_weight = rgb_l1_weight
        self.rgb_l2_weight = rgb_l2_weight
        self.head_mask_weight = head_mask_weight
        self.rgb_dssim_weight = rgb_dssim_weight
        self.sdf_consistency_weight = sdf_consistency_weight
        self.eikonal_weight = eikonal_weight
        self.anchor_deform_loss_weight = anchor_deform_loss_weight
        self.anchor_scale_loss_weight = anchor_scale_loss_weight
        self.anchor_opacity_loss_weight = anchor_opacity_loss_weight
        self.texture_neural_uv_delta_loss_weight = texture_neural_uv_delta_loss_weight
        self.fine_rgb_reg_loss_weight = fine_rgb_reg_loss_weight

    def get_dssim_loss(self, pred_nchw, gt_nchw):
        return _dssim_loss(pred_nchw, gt_nchw)

    def __call__(self, model_outputs, ground_truth):
        predicted_mask = model_outputs['predicted_mask']
        object_mask = ground_truth['object_mask']
        rgb_pred = model_outputs['rgb_image']
        rgb_gt = ground_truth['rgb']

        gs_alpha = model_outputs.get('alpha_no_anchor', predicted_mask)
        head_mask = ground_truth.get('head_mask', jnp.zeros_like(gs_alpha))
        sdf_values = model_outputs.get('sdf_values',
                                       jnp.zeros((8, 1), jnp.float32))
        grad_thetas = model_outputs.get('grad_thetas',
                                        jnp.ones((8, 3), jnp.float32))
        if self.sdf_consistency_weight > 0:
            assert grad_thetas.ndim == 2 and grad_thetas.shape[1] == 3

        # single fused (gridded) kernel for all small scalar losses
        sc = _fused_scalar_losses(rgb_pred, rgb_gt, predicted_mask, object_mask,
                                  gs_alpha, head_mask, sdf_values, grad_thetas)

        rgb_loss = sc['rgb_l1']
        mask_loss = sc['mask']
        loss = self.rgb_l1_weight * rgb_loss + self.mask_weight * mask_loss
        out = {'rgb_loss': rgb_loss, 'mask_loss': mask_loss}

        if self.rgb_l2_weight > 0.0:
            loss = loss + self.rgb_l2_weight * sc['rgb_l2']
            out['rgb_l2_loss'] = sc['rgb_l2']

        if self.head_mask_weight > 0.0:
            loss = loss + self.head_mask_weight * sc['head_mask']
            out['head_mask_loss'] = sc['head_mask']

        if self.rgb_dssim_weight > 0.0:
            bz = model_outputs['batch_size']
            img_res = model_outputs['img_res']
            gt_img = jnp.transpose(
                rgb_gt.reshape(bz, img_res[0], img_res[1], 3), (0, 3, 1, 2))
            pred_img = jnp.transpose(
                rgb_pred.reshape(bz, img_res[0], img_res[1], 3), (0, 3, 1, 2))
            dssim = self.get_dssim_loss(pred_img, gt_img)
            loss = loss + self.rgb_dssim_weight * dssim
            out['dssim_loss'] = dssim

        if 'anchor_deform_loss' in model_outputs:
            out['anchor_deform_loss'] = model_outputs['anchor_deform_loss']
            loss = loss + model_outputs['anchor_deform_loss'] * self.anchor_deform_loss_weight
        if 'anchor_scale_loss' in model_outputs:
            out['anchor_scale_loss'] = model_outputs['anchor_scale_loss']
            loss = loss + model_outputs['anchor_scale_loss'] * self.anchor_scale_loss_weight
        if 'anchor_opacity_loss' in model_outputs:
            out['anchor_opacity_loss'] = model_outputs['anchor_opacity_loss']
            loss = loss + model_outputs['anchor_opacity_loss'] * self.anchor_opacity_loss_weight
        if 'delta_uv_loss' in model_outputs:
            out['texture_neural_uv_delta_loss'] = model_outputs['delta_uv_loss']
            loss = loss + model_outputs['delta_uv_loss'] * self.texture_neural_uv_delta_loss_weight
        if 'fine_rgb_reg_loss' in model_outputs:
            out['fine_rgb_reg_loss'] = model_outputs['fine_rgb_reg_loss']
            loss = loss + model_outputs['fine_rgb_reg_loss'] * self.fine_rgb_reg_loss_weight

        if self.sdf_consistency_weight > 0:
            assert self.eikonal_weight > 0
            loss = (loss + sc['sdf'] * self.sdf_consistency_weight
                    + sc['eikonal'] * self.eikonal_weight)
            out['sdf_consistency'] = sc['sdf']
            out['eikonal'] = sc['eikonal']

        out['loss'] = loss
        return out


# ---------------------------------------------------------------------------
# Pure-JAX reference (numerical sanity check)
# ---------------------------------------------------------------------------
def _reference(mo, gtd, cfg):
    rgb_p = mo['rgb_image'].reshape(-1, 3).astype(jnp.float32)
    rgb_g = gtd['rgb'].reshape(-1, 3).astype(jnp.float32)
    rgb_loss = jnp.mean(jnp.abs(rgb_p - rgb_g))
    mask_loss = jnp.mean(jnp.abs(mo['predicted_mask'].reshape(-1)
                                 - gtd['object_mask'].reshape(-1)))
    rgb_l2 = jnp.mean((rgb_p - rgb_g) ** 2)
    a = mo['predicted_mask'].reshape(-1)
    m = gtd['head_mask'].reshape(-1)
    head = jnp.mean(jnp.where(a > m, (a - m) ** 2, 0.0))

    bz = mo['batch_size']
    H, W = mo['img_res']
    pred = jnp.transpose(mo['rgb_image'].reshape(bz, H, W, 3), (0, 3, 1, 2))
    gt = jnp.transpose(gtd['rgb'].reshape(bz, H, W, 3), (0, 3, 1, 2))
    g = _gaussian_1d()
    w2d = jnp.asarray(np.outer(g, g), jnp.float32)
    C = pred.shape[1]
    kern = jnp.broadcast_to(w2d[None, None], (C, 1, WINDOW_SIZE, WINDOW_SIZE))
    pad = WINDOW_SIZE // 2

    def conv(x):
        return jax.lax.conv_general_dilated(
            x, kern, (1, 1), [(pad, pad), (pad, pad)],
            dimension_numbers=('NCHW', 'OIHW', 'NCHW'),
            feature_group_count=C, precision=jax.lax.Precision.HIGHEST)

    mu1, mu2 = conv(pred), conv(gt)
    s1 = conv(pred * pred) - mu1 ** 2
    s2 = conv(gt * gt) - mu2 ** 2
    s12 = conv(pred * gt) - mu1 * mu2
    smap = ((2 * mu1 * mu2 + _C1) * (2 * s12 + _C2)) / (
        (mu1 ** 2 + mu2 ** 2 + _C1) * (s1 + s2 + _C2))
    dssim = jnp.mean(jnp.stack([1.0 - jnp.mean(smap[i]) for i in range(bz)]))

    sdf = jnp.mean(mo['sdf_values'] ** 2)
    eik = jnp.mean((jnp.linalg.norm(mo['grad_thetas'], axis=1) - 1.0) ** 2)
    loss = (cfg['rgb_l1_weight'] * rgb_loss + cfg['mask_weight'] * mask_loss
            + cfg['rgb_l2_weight'] * rgb_l2 + cfg['head_mask_weight'] * head
            + cfg['rgb_dssim_weight'] * dssim
            + mo['anchor_deform_loss'] * cfg['anchor_deform_loss_weight']
            + cfg['sdf_consistency_weight'] * sdf + cfg['eikonal_weight'] * eik)
    return {'loss': loss, 'rgb_loss': rgb_loss, 'mask_loss': mask_loss,
            'rgb_l2_loss': rgb_l2, 'head_mask_loss': head, 'dssim_loss': dssim,
            'anchor_deform_loss': mo['anchor_deform_loss'],
            'sdf_consistency': sdf, 'eikonal': eik}


if __name__ == "__main__":
    key = jax.random.PRNGKey(0)
    bz, H, W = 2, 16, 16
    ks = jax.random.split(key, 7)
    rgb_pred = jax.random.uniform(ks[0], (bz, H * W, 3), jnp.float32)
    rgb_gt = jax.random.uniform(ks[1], (bz, H * W, 3), jnp.float32)
    pred_mask = jax.random.uniform(ks[2], (bz, H * W), jnp.float32)
    obj_mask = (jax.random.uniform(ks[3], (bz, H * W)) > 0.5).astype(jnp.float32)
    head_mask = (jax.random.uniform(ks[4], (bz, H * W)) > 0.5).astype(jnp.float32)
    sdf_values = 0.1 * jax.random.normal(ks[5], (128, 1), jnp.float32)
    grad_thetas = jax.random.normal(ks[6], (128, 3), jnp.float32)
    anchor_deform_loss = jnp.float32(0.01)

    model_outputs = {
        'predicted_mask': pred_mask,
        'rgb_image': rgb_pred,
        'sdf_values': sdf_values,
        'grad_thetas': grad_thetas,
        'anchor_deform_loss': anchor_deform_loss,
        'batch_size': bz,
        'img_res': (H, W),
    }
    ground_truth = {
        'object_mask': obj_mask,
        'rgb': rgb_gt,
        'head_mask': head_mask,
    }

    cfg = dict(mask_weight=0.1, rgb_l1_weight=1.0, rgb_l2_weight=0.05,
               head_mask_weight=0.1, rgb_dssim_weight=0.2,
               sdf_consistency_weight=0.1, eikonal_weight=0.1,
               anchor_deform_loss_weight=1.0)
    loss_mod = PallasLoss(**cfg)

    out = loss_mod(model_outputs, ground_truth)
    out = {k: jax.block_until_ready(v) for k, v in out.items()}

    ref = _reference(model_outputs, ground_truth, cfg)
    for k in ref:
        np.testing.assert_allclose(np.asarray(out[k]), np.asarray(ref[k]),
                                   rtol=1e-3, atol=1e-4, err_msg=k)

    print("KERNEL_OK")
</pallas_src>

<mosaic_0001>
module attributes {stable_mosaic.version = 11 : i64} {
  func.func @_fused_scalar_kernel(%arg0: i32, %arg1: memref<12x128xf32, #tpu.memory_space<vmem>>, %arg2: memref<12x128xf32, #tpu.memory_space<vmem>>, %arg3: memref<4x128xf32, #tpu.memory_space<vmem>>, %arg4: memref<4x128xf32, #tpu.memory_space<vmem>>, %arg5: memref<4x128xf32, #tpu.memory_space<vmem>>, %arg6: memref<4x128xf32, #tpu.memory_space<vmem>>, %arg7: memref<1x128xf32, #tpu.memory_space<vmem>>, %arg8: memref<3x128xf32, #tpu.memory_space<vmem>>, %arg9: memref<1x128xf32, #tpu.memory_space<vmem>>) attributes {dimension_semantics = [#tpu.dimension_semantics<arbitrary>], iteration_bounds = array<i64: 1>, scalar_prefetch = 0 : i64, scratch_operands = 0 : i64, tpu.core_type = #tpu.core_type<tc>, window_params = [{transform_indices = @transform_0, window_bounds = array<i64: 12, 128>}, {transform_indices = @transform_1, window_bounds = array<i64: 12, 128>}, {transform_indices = @transform_2, window_bounds = array<i64: 4, 128>}, {transform_indices = @transform_3, window_bounds = array<i64: 4, 128>}, {transform_indices = @transform_4, window_bounds = array<i64: 4, 128>}, {transform_indices = @transform_5, window_bounds = array<i64: 4, 128>}, {pipeline_mode = #tpu.pipeline_mode<synchronous>, transform_indices = @transform_6, window_bounds = array<i64: 1, 128>}, {pipeline_mode = #tpu.pipeline_mode<synchronous>, transform_indices = @transform_7, window_bounds = array<i64: 3, 128>}, {pipeline_mode = #tpu.pipeline_mode<synchronous>, transform_indices = @transform_8, window_bounds = array<i64: 1, 128>}]} {
    %c0 = arith.constant 0 : index
    %c0_0 = arith.constant 0 : index
    %0 = vector.load %arg1[%c0, %c0_0] : memref<12x128xf32, #tpu.memory_space<vmem>>, vector<12x128xf32>
    %c0_1 = arith.constant 0 : index
    %c0_2 = arith.constant 0 : index
    %1 = vector.load %arg2[%c0_1, %c0_2] : memref<12x128xf32, #tpu.memory_space<vmem>>, vector<12x128xf32>
    %2 = arith.subf %0, %1 : vector<12x128xf32>
    %3 = tpu.iota {dimensions = array<i32: 0>} : vector<12x128xi32>
    %c12_i32 = arith.constant 12 : i32
    %4 = arith.muli %arg0, %c12_i32 : i32
    %5 = vector.broadcast %4 : i32 to vector<12x128xi32>
    %6 = arith.addi %3, %5 : vector<12x128xi32>
    %c12_i32_3 = arith.constant 12 : i32
    %7 = vector.broadcast %c12_i32_3 : i32 to vector<12x128xi32>
    %8 = arith.cmpi slt, %6, %7 : vector<12x128xi32>
    %cst = arith.constant 0.000000e+00 : f32
    %9 = vector.broadcast %cst : f32 to vector<12x128xf32>
    %10 = arith.select %8, %2, %9 : vector<12x128xi1>, vector<12x128xf32>
    %11 = math.absf %10 : vector<12x128xf32>
    %cst_4 = arith.constant dense<0.000000e+00> : vector<12xf32>
    %12 = vector.multi_reduction <add>, %11, %cst_4 [1] : vector<12x128xf32> to vector<12xf32>
    %13 = vector.shape_cast %12 : vector<12xf32> to vector<12x1xf32>
    %cst_5 = arith.constant dense<0.000000e+00> : vector<1xf32>
    %14 = vector.multi_reduction <add>, %13, %cst_5 [0] : vector<12x1xf32> to vector<1xf32>
    %15 = vector.shape_cast %14 : vector<1xf32> to vector<1x1xf32>
    %cst_6 = arith.constant 6.51041686E-4 : f32
    %16 = vector.broadcast %cst_6 : f32 to vector<1x1xf32>
    %17 = arith.mulf %15, %16 : vector<1x1xf32>
    %18 = arith.mulf %10, %10 : vector<12x128xf32>
    %cst_7 = arith.constant dense<0.000000e+00> : vector<12xf32>
    %19 = vector.multi_reduction <add>, %18, %cst_7 [1] : vector<12x128xf32> to vector<12xf32>
    %20 = vector.shape_cast %19 : vector<12xf32> to vector<12x1xf32>
    %cst_8 = arith.constant dense<0.000000e+00> : vector<1xf32>
    %21 = vector.multi_reduction <add>, %20, %cst_8 [0] : vector<12x1xf32> to vector<1xf32>
    %22 = vector.shape_cast %21 : vector<1xf32> to vector<1x1xf32>
    %cst_9 = arith.constant 6.51041686E-4 : f32
    %23 = vector.broadcast %cst_9 : f32 to vector<1x1xf32>
    %24 = arith.mulf %22, %23 : vector<1x1xf32>
    %c0_10 = arith.constant 0 : index
    %c0_11 = arith.constant 0 : index
    %25 = vector.load %arg3[%c0_10, %c0_11] : memref<4x128xf32, #tpu.memory_space<vmem>>, vector<4x128xf32>
    %c0_12 = arith.constant 0 : index
    %c0_13 = arith.constant 0 : index
    %26 = vector.load %arg4[%c0_12, %c0_13] : memref<4x128xf32, #tpu.memory_space<vmem>>, vector<4x128xf32>
    %27 = arith.subf %25, %26 : vector<4x128xf32>
    %28 = tpu.iota {dimensions = array<i32: 0>} : vector<4x128xi32>
    %c4_i32 = arith.constant 4 : i32
    %29 = arith.muli %arg0, %c4_i32 : i32
    %30 = vector.broadcast %29 : i32 to vector<4x128xi32>
    %31 = arith.addi %28, %30 : vector<4x128xi32>
    %c4_i32_14 = arith.constant 4 : i32
    %32 = vector.broadcast %c4_i32_14 : i32 to vector<4x128xi32>
    %33 = arith.cmpi slt, %31, %32 : vector<4x128xi32>
    %cst_15 = arith.constant 0.000000e+00 : f32
    %34 = vector.broadcast %cst_15 : f32 to vector<4x128xf32>
    %35 = arith.select %33, %27, %34 : vector<4x128xi1>, vector<4x128xf32>
    %36 = math.absf %35 : vector<4x128xf32>
    %cst_16 = arith.constant dense<0.000000e+00> : vector<4xf32>
    %37 = vector.multi_reduction <add>, %36, %cst_16 [1] : vector<4x128xf32> to vector<4xf32>
    %38 = vector.shape_cast %37 : vector<4xf32> to vector<4x1xf32>
    %cst_17 = arith.constant dense<0.000000e+00> : vector<1xf32>
    %39 = vector.multi_reduction <add>, %38, %cst_17 [0] : vector<4x1xf32> to vector<1xf32>
    %40 = vector.shape_cast %39 : vector<1xf32> to vector<1x1xf32>
    %cst_18 = arith.constant 0.001953125 : f32
    %41 = vector.broadcast %cst_18 : f32 to vector<1x1xf32>
    %42 = arith.mulf %40, %41 : vector<1x1xf32>
    %c0_19 = arith.constant 0 : index
    %c0_20 = arith.constant 0 : index
    %43 = vector.load %arg5[%c0_19, %c0_20] : memref<4x128xf32, #tpu.memory_space<vmem>>, vector<4x128xf32>
    %c0_21 = arith.constant 0 : index
    %c0_22 = arith.constant 0 : index
    %44 = vector.load %arg6[%c0_21, %c0_22] : memref<4x128xf32, #tpu.memory_space<vmem>>, vector<4x128xf32>
    %45 = arith.subf %43, %44 : vector<4x128xf32>
    %46 = arith.cmpf ogt, %43, %44 : vector<4x128xf32>
    %47 = arith.mulf %45, %45 : vector<4x128xf32>
    %cst_23 = arith.constant 0.000000e+00 : f32
    %48 = vector.broadcast %cst_23 : f32 to vector<4x128xf32>
    %49 = arith.select %46, %47, %48 : vector<4x128xi1>, vector<4x128xf32>
    %50 = tpu.iota {dimensions = array<i32: 0>} : vector<4x128xi32>
    %c4_i32_24 = arith.constant 4 : i32
    %51 = arith.muli %arg0, %c4_i32_24 : i32
    %52 = vector.broadcast %51 : i32 to vector<4x128xi32>
    %53 = arith.addi %50, %52 : vector<4x128xi32>
    %c4_i32_25 = arith.constant 4 : i32
    %54 = vector.broadcast %c4_i32_25 : i32 to vector<4x128xi32>
    %55 = arith.cmpi slt, %53, %54 : vector<4x128xi32>
    %cst_26 = arith.constant 0.000000e+00 : f32
    %56 = vector.broadcast %cst_26 : f32 to vector<4x128xf32>
    %57 = arith.select %55, %49, %56 : vector<4x128xi1>, vector<4x128xf32>
    %cst_27 = arith.constant dense<0.000000e+00> : vector<4xf32>
    %58 = vector.multi_reduction <add>, %57, %cst_27 [1] : vector<4x128xf32> to vector<4xf32>
    %59 = vector.shape_cast %58 : vector<4xf32> to vector<4x1xf32>
    %cst_28 = arith.constant dense<0.000000e+00> : vector<1xf32>
    %60 = vector.multi_reduction <add>, %59, %cst_28 [0] : vector<4x1xf32> to vector<1xf32>
    %61 = vector.shape_cast %60 : vector<1xf32> to vector<1x1xf32>
    %cst_29 = arith.constant 0.001953125 : f32
    %62 = vector.broadcast %cst_29 : f32 to vector<1x1xf32>
    %63 = arith.mulf %61, %62 : vector<1x1xf32>
    %64 = tpu.iota {dimensions = array<i32: 1>} : vector<1x128xi32>
    %c0_i32 = arith.constant 0 : i32
    %65 = vector.broadcast %c0_i32 : i32 to vector<1x128xi32>
    %66 = arith.cmpi eq, %64, %65 : vector<1x128xi32>
    %cst_30 = arith.constant 0.000000e+00 : f32
    %67 = vector.shape_cast %17 : vector<1x1xf32> to vector<1x1xf32>
    %68 = vector.broadcast %67 : vector<1x1xf32> to vector<1x128xf32>
    %69 = vector.broadcast %cst_30 : f32 to vector<1x128xf32>
    %70 = arith.select %66, %68, %69 : vector<1x128xi1>, vector<1x128xf32>
    %c1_i32 = arith.constant 1 : i32
    %71 = vector.broadcast %c1_i32 : i32 to vector<1x128xi32>
    %72 = arith.cmpi eq, %64, %71 : vector<1x128xi32>
    %cst_31 = arith.constant 0.000000e+00 : f32
    %73 = vector.shape_cast %24 : vector<1x1xf32> to vector<1x1xf32>
    %74 = vector.broadcast %73 : vector<1x1xf32> to vector<1x128xf32>
    %75 = vector.broadcast %cst_31 : f32 to vector<1x128xf32>
    %76 = arith.select %72, %74, %75 : vector<1x128xi1>, vector<1x128xf32>
    %77 = arith.addf %70, %76 : vector<1x128xf32>
    %c2_i32 = arith.constant 2 : i32
    %78 = vector.broadcast %c2_i32 : i32 to vector<1x128xi32>
    %79 = arith.cmpi eq, %64, %78 : vector<1x128xi32>
    %cst_32 = arith.constant 0.000000e+00 : f32
    %80 = vector.shape_cast %42 : vector<1x1xf32> to vector<1x1xf32>
    %81 = vector.broadcast %80 : vector<1x1xf32> to vector<1x128xf32>
    %82 = vector.broadcast %cst_32 : f32 to vector<1x128xf32>
    %83 = arith.select %79, %81, %82 : vector<1x128xi1>, vector<1x128xf32>
    %84 = arith.addf %77, %83 : vector<1x128xf32>
    %c3_i32 = arith.constant 3 : i32
    %85 = vector.broadcast %c3_i32 : i32 to vector<1x128xi32>
    %86 = arith.cmpi eq, %64, %85 : vector<1x128xi32>
    %cst_33 = arith.constant 0.000000e+00 : f32
    %87 = vector.shape_cast %63 : vector<1x1xf32> to vector<1x1xf32>
    %88 = vector.broadcast %87 : vector<1x1xf32> to vector<1x128xf32>
    %89 = vector.broadcast %cst_33 : f32 to vector<1x128xf32>
    %90 = arith.select %86, %88, %89 : vector<1x128xi1>, vector<1x128xf32>
    %91 = arith.addf %84, %90 : vector<1x128xf32>
    %c0_i32_34 = arith.constant 0 : i32
    %92 = arith.cmpi eq, %arg0, %c0_i32_34 : i32
    %93 = arith.extui %92 : i1 to i32
    %c0_i32_35 = arith.constant 0 : i32
    %94 = arith.cmpi ne, %93, %c0_i32_35 : i32
    scf.if %94 {
      %c0_38 = arith.constant 0 : index
      %c0_39 = arith.constant 0 : index
      %98 = vector.load %arg7[%c0_38, %c0_39] : memref<1x128xf32, #tpu.memory_space<vmem>>, vector<1x128xf32>
      %99 = arith.mulf %98, %98 : vector<1x128xf32>
      %cst_40 = arith.constant dense<0.000000e+00> : vector<1xf32>
      %100 = vector.multi_reduction <add>, %99, %cst_40 [1] : vector<1x128xf32> to vector<1xf32>
      %101 = vector.shape_cast %100 : vector<1xf32> to vector<1x1xf32>
      %cst_41 = arith.constant dense<0.000000e+00> : vector<1xf32>
      %102 = vector.multi_reduction <add>, %101, %cst_41 [0] : vector<1x1xf32> to vector<1xf32>
      %103 = vector.shape_cast %102 : vector<1xf32> to vector<1x1xf32>
      %cst_42 = arith.constant 7.812500e-03 : f32
      %104 = vector.broadcast %cst_42 : f32 to vector<1x1xf32>
      %105 = arith.mulf %103, %104 : vector<1x1xf32>
      %c0_43 = arith.constant 0 : index
      %c0_44 = arith.constant 0 : index
      %106 = vector.load %arg8[%c0_43, %c0_44] : memref<3x128xf32, #tpu.memory_space<vmem>>, vector<3x128xf32>
      %107 = arith.mulf %106, %106 : vector<3x128xf32>
      %cst_45 = arith.constant dense<0.000000e+00> : vector<128xf32>
      %108 = vector.multi_reduction <add>, %107, %cst_45 [0] : vector<3x128xf32> to vector<128xf32>
      %109 = vector.shape_cast %108 : vector<128xf32> to vector<1x128xf32>
      %110 = math.sqrt %109 : vector<1x128xf32>
      %cst_46 = arith.constant 1.000000e+00 : f32
      %111 = vector.broadcast %cst_46 : f32 to vector<1x128xf32>
      %112 = arith.subf %110, %111 : vector<1x128xf32>
      %113 = arith.mulf %112, %112 : vector<1x128xf32>
      %cst_47 = arith.constant dense<0.000000e+00> : vector<1xf32>
      %114 = vector.multi_reduction <add>, %113, %cst_47 [1] : vector<1x128xf32> to vector<1xf32>
      %115 = vector.shape_cast %114 : vector<1xf32> to vector<1x1xf32>
      %cst_48 = arith.constant 7.812500e-03 : f32
      %116 = vector.broadcast %cst_48 : f32 to vector<1x1xf32>
      %117 = arith.mulf %115, %116 : vector<1x1xf32>
      %c4_i32_49 = arith.constant 4 : i32
      %118 = vector.broadcast %c4_i32_49 : i32 to vector<1x128xi32>
      %119 = arith.cmpi eq, %64, %118 : vector<1x128xi32>
      %cst_50 = arith.constant 0.000000e+00 : f32
      %120 = vector.shape_cast %105 : vector<1x1xf32> to vector<1x1xf32>
      %121 = vector.broadcast %120 : vector<1x1xf32> to vector<1x128xf32>
      %122 = vector.broadcast %cst_50 : f32 to vector<1x128xf32>
      %123 = arith.select %119, %121, %122 : vector<1x128xi1>, vector<1x128xf32>
      %124 = arith.addf %91, %123 : vector<1x128xf32>
      %c5_i32 = arith.constant 5 : i32
      %125 = vector.broadcast %c5_i32 : i32 to vector<1x128xi32>
      %126 = arith.cmpi eq, %64, %125 : vector<1x128xi32>
      %cst_51 = arith.constant 0.000000e+00 : f32
      %127 = vector.shape_cast %117 : vector<1x1xf32> to vector<1x1xf32>
      %128 = vector.broadcast %127 : vector<1x1xf32> to vector<1x128xf32>
      %129 = vector.broadcast %cst_51 : f32 to vector<1x128xf32>
      %130 = arith.select %126, %128, %129 : vector<1x128xi1>, vector<1x128xf32>
      %131 = arith.addf %124, %130 : vector<1x128xf32>
      %c0_52 = arith.constant 0 : index
      %c0_53 = arith.constant 0 : index
      %132 = vector.load %arg9[%c0_52, %c0_53] : memref<1x128xf32, #tpu.memory_space<vmem>>, vector<1x128xf32>
      tpu.vector_store %arg9[%c0_52, %c0_53], %131 {strides = array<i32>} : memref<1x128xf32, #tpu.memory_space<vmem>>, vector<1x128xf32>,
    } else {
    }
    %c0_i32_36 = arith.constant 0 : i32
    %95 = arith.cmpi sgt, %arg0, %c0_i32_36 : i32
    %96 = arith.extui %95 : i1 to i32
    %c0_i32_37 = arith.constant 0 : i32
    %97 = arith.cmpi ne, %96, %c0_i32_37 : i32
    scf.if %97 {
      %c0_38 = arith.constant 0 : index
      %c0_39 = arith.constant 0 : index
      %98 = vector.load %arg9[%c0_38, %c0_39] : memref<1x128xf32, #tpu.memory_space<vmem>>, vector<1x128xf32>
      %99 = arith.addf %98, %91 : vector<1x128xf32>
      %c0_40 = arith.constant 0 : index
      %c0_41 = arith.constant 0 : index
      %100 = vector.load %arg9[%c0_40, %c0_41] : memref<1x128xf32, #tpu.memory_space<vmem>>, vector<1x128xf32>
      tpu.vector_store %arg9[%c0_40, %c0_41], %99 {strides = array<i32>} : memref<1x128xf32, #tpu.memory_space<vmem>>, vector<1x128xf32>,
    } else {
    }
    return
  }
  func.func @transform_0(%arg0: i32) -> (i32, i32) {
    %c0_i32 = arith.constant 0 : i32
    %0 = arith.minsi %arg0, %c0_i32 : i32
    %c0_i32_0 = arith.constant 0 : i32
    %c0_i32_1 = arith.constant 0 : i32
    return %0, %c0_i32_0 : i32, i32
  }
  func.func @transform_1(%arg0: i32) -> (i32, i32) {
    %c0_i32 = arith.constant 0 : i32
    %0 = arith.minsi %arg0, %c0_i32 : i32
    %c0_i32_0 = arith.constant 0 : i32
    %c0_i32_1 = arith.constant 0 : i32
    return %0, %c0_i32_0 : i32, i32
  }
  func.func @transform_2(%arg0: i32) -> (i32, i32) {
    %c0_i32 = arith.constant 0 : i32
    %0 = arith.minsi %arg0, %c0_i32 : i32
    %c0_i32_0 = arith.constant 0 : i32
    %c0_i32_1 = arith.constant 0 : i32
    return %0, %c0_i32_0 : i32, i32
  }
  func.func @transform_3(%arg0: i32) -> (i32, i32) {
    %c0_i32 = arith.constant 0 : i32
    %0 = arith.minsi %arg0, %c0_i32 : i32
    %c0_i32_0 = arith.constant 0 : i32
    %c0_i32_1 = arith.constant 0 : i32
    return %0, %c0_i32_0 : i32, i32
  }
  func.func @transform_4(%arg0: i32) -> (i32, i32) {
    %c0_i32 = arith.constant 0 : i32
    %0 = arith.minsi %arg0, %c0_i32 : i32
    %c0_i32_0 = arith.constant 0 : i32
    %c0_i32_1 = arith.constant 0 : i32
    return %0, %c0_i32_0 : i32, i32
  }
  func.func @transform_5(%arg0: i32) -> (i32, i32) {
    %c0_i32 = arith.constant 0 : i32
    %0 = arith.minsi %arg0, %c0_i32 : i32
    %c0_i32_0 = arith.constant 0 : i32
    %c0_i32_1 = arith.constant 0 : i32
    return %0, %c0_i32_0 : i32, i32
  }
  func.func @transform_6(%arg0: i32) -> (i32, i32) {
    %c0_i32 = arith.constant 0 : i32
    %c0_i32_0 = arith.constant 0 : i32
    %c0_i32_1 = arith.constant 0 : i32
    return %c0_i32, %c0_i32_0 : i32, i32
  }
  func.func @transform_7(%arg0: i32) -> (i32, i32) {
    %c0_i32 = arith.constant 0 : i32
    %c0_i32_0 = arith.constant 0 : i32
    %c0_i32_1 = arith.constant 0 : i32
    return %c0_i32, %c0_i32_0 : i32, i32
  }
  func.func @transform_8(%arg0: i32) -> (i32, i32) {
    %c0_i32 = arith.constant 0 : i32
    %c0_i32_0 = arith.constant 0 : i32
    %c0_i32_1 = arith.constant 0 : i32
    return %c0_i32, %c0_i32_0 : i32, i32
  }
}

</mosaic_0001>

<llo_original>
// kernel: tpu_custom_call.1
$region0: #{tpu_custom_call.1}
  #allocation0 [shape = 'u32[]', space=smem, size = 0x4, offset = 0x4, fixed_abs, tag = 'smem constant byte address 0x4 - core index']
  #allocation1 [shape = 'u32[144,128]{1,0:T(1,128)}', space=vmem, size = 0x12000, scoped, tag = 'internal scratch']
  %s0 = inlined_call_operand.hbm [shape: f32[12,128], index: 0, kind: input, shape index: {}]
  %s1 = inlined_call_operand.hbm [shape: f32[12,128], index: 1, kind: input, shape index: {}]
  %s2 = inlined_call_operand.hbm [shape: f32[4,128], index: 2, kind: input, shape index: {}]
  %s3 = inlined_call_operand.hbm [shape: f32[4,128], index: 3, kind: input, shape index: {}]
  %s4 = inlined_call_operand.hbm [shape: f32[4,128], index: 4, kind: input, shape index: {}]
  %s5 = inlined_call_operand.hbm [shape: f32[4,128], index: 5, kind: input, shape index: {}]
  %s6 = inlined_call_operand.hbm [shape: f32[1,128], index: 6, kind: input, shape index: {}]
  %s7 = inlined_call_operand.hbm [shape: f32[3,128], index: 7, kind: input, shape index: {}]
  %s8 = inlined_call_operand.hbm [shape: f32[1,128], index: 8, kind: output, shape index: {}]
  %s9 = sld [smem:[#allocation0]]
  $region82: #{tpu_custom_call.1} parent=0
    _
  %s11 = ssub.s32 1, %s9
  %s12 = scalar_select 0, %s11, %s9
  $region1: #{tpu_custom_call.1} parent=0
    #allocation2 [shape = 'u8[8192]{0}', space=vmem, size = 0x2000, scoped, tag = 'input window, operand 0, single buffered']
    #allocation3 [shape = 's32[1]{0}', space=sflag, size = 0x4, scoped, tag = 'scoped memory for tpu_custom_call.1']
    #allocation4 [shape = 's32[1]{0}', space=sflag, size = 0x4, scoped, tag = 'scoped memory for tpu_custom_call.1']
    #allocation5 [shape = 'u8[8192]{0}', space=vmem, size = 0x2000, scoped, tag = 'input window, operand 1, single buffered']
    #allocation6 [shape = 's32[1]{0}', space=sflag, size = 0x4, scoped, tag = 'scoped memory for tpu_custom_call.1']
    #allocation7 [shape = 'u8[2048]{0}', space=vmem, size = 0x800, scoped, tag = 'input window, operand 2, single buffered']
    #allocation8 [shape = 'u8[2048]{0}', space=vmem, size = 0x800, scoped, tag = 'input window, operand 3, single buffered']
    #allocation9 [shape = 's32[1]{0}', space=sflag, size = 0x4, scoped, tag = 'scoped memory for tpu_custom_call.1']
    #allocation10 [shape = 'u8[2048]{0}', space=vmem, size = 0x800, scoped, tag = 'input window, operand 4, single buffered']
    #allocation11 [shape = 'u8[2048]{0}', space=vmem, size = 0x800, scoped, tag = 'input window, operand 5, single buffered']
    #allocation12 [shape = 's32[1]{0}', space=sflag, size = 0x4, scoped, tag = 'scoped memory for tpu_custom_call.1']
    #allocation13 [shape = 'u8[512]{0}', space=vmem, size = 0x400, scoped, tag = 'input window, operand 6, single buffered']
    #allocation14 [shape = 'u8[2048]{0}', space=vmem, size = 0x800, scoped, tag = 'input window, operand 7, single buffered']
    #allocation15 [shape = 's32[1]{0}', space=sflag, size = 0x4, scoped, tag = 'scoped memory for tpu_custom_call.1']
    #allocation16 [shape = 'u8[512]{0}', space=vmem, size = 0x400, scoped, tag = 'output window, operand 0, single buffered']
    %13 = vsyncpa [#allocation3], 0
    %14 = vsyncpa [#allocation6], 0
    %15 = vsyncpa [#allocation9], 0
    %16 = vsyncpa [#allocation12], 0
    %17 = vsyncpa [#allocation15], 0
    %18 = vsyncpa [#allocation4], 0
    // Predicated region
    $region2: #{tpu_custom_call.1} parent=1 // pred_check
      _
    $region3: #{tpu_custom_call.1} parent=1 // pred_check_branch
      %20 = sbr.rel (0) target = $region5
    $region4: #{tpu_custom_call.1} parent=1 // pred_region
      %s22 = ssub.s32 256, 256
      %23 = vsyncadd [#allocation3], %s22
      %s24 = sshll.u32 [#allocation2], 4
      %s25 = int_to_ptr.vmem [resolvable:$true] %s24
      %30 = dma.hbm_to_vmem [thread:$0]  %s0, 256, %s25, [#allocation3], 128, 128, 8
    $region5: #{tpu_custom_call.1} parent=1 // pred_fallthru
      _
    // Predicated region
    $region6: #{tpu_custom_call.1} parent=1 // pred_check
      _
    $region7: #{tpu_custom_call.1} parent=1 // pred_check_branch
      %32 = sbr.rel (0) target = $region9
    $region8: #{tpu_custom_call.1} parent=1 // pred_region
      %s34 = ssub.s32 256, 256
      %35 = vsyncadd [#allocation6], %s34
      %s36 = sshll.u32 [#allocation5], 4
      %s37 = int_to_ptr.vmem [resolvable:$true] %s36
      %42 = dma.hbm_to_vmem [thread:$0]  %s1, 256, %s37, [#allocation6], 128, 128, 8
    $region9: #{tpu_custom_call.1} parent=1 // pred_fallthru
      _
    // Predicated region
    $region10: #{tpu_custom_call.1} parent=1 // pred_check
      _
    $region11: #{tpu_custom_call.1} parent=1 // pred_check_branch
      %44 = sbr.rel (0) target = $region13
    $region12: #{tpu_custom_call.1} parent=1 // pred_region
      %s46 = ssub.s32 64, 64
      %47 = vsyncadd [#allocation6], %s46
      %s49 = sshll.u32 [#allocation7], 4
      %s50 = int_to_ptr.vmem [resolvable:$true] %s49
      %52 = dma.hbm_to_vmem [thread:$0]  %s2, 64, %s50, [#allocation6]
    $region13: #{tpu_custom_call.1} parent=1 // pred_fallthru
      _
    // Predicated region
    $region14: #{tpu_custom_call.1} parent=1 // pred_check
      _
    $region15: #{tpu_custom_call.1} parent=1 // pred_check_branch
      %54 = sbr.rel (0) target = $region17
    $region16: #{tpu_custom_call.1} parent=1 // pred_region
      %s56 = ssub.s32 64, 64
      %57 = vsyncadd [#allocation9], %s56
      %s59 = sshll.u32 [#allocation8], 4
      %s60 = int_to_ptr.vmem [resolvable:$true] %s59
      %62 = dma.hbm_to_vmem [thread:$0]  %s3, 64, %s60, [#allocation9]
    $region17: #{tpu_custom_call.1} parent=1 // pred_fallthru
      _
    // Predicated region
    $region18: #{tpu_custom_call.1} parent=1 // pred_check
      _
    $region19: #{tpu_custom_call.1} parent=1 // pred_check_branch
      %64 = sbr.rel (0) target = $region21
    $region20: #{tpu_custom_call.1} parent=1 // pred_region
      %s66 = ssub.s32 64, 64
      %67 = vsyncadd [#allocation9], %s66
      %s69 = sshll.u32 [#allocation10], 4
      %s70 = int_to_ptr.vmem [resolvable:$true] %s69
      %72 = dma.hbm_to_vmem [thread:$0]  %s4, 64, %s70, [#allocation9]
    $region21: #{tpu_custom_call.1} parent=1 // pred_fallthru
      _
    // Predicated region
    $region22: #{tpu_custom_call.1} parent=1 // pred_check
      _
    $region23: #{tpu_custom_call.1} parent=1 // pred_check_branch
      %74 = sbr.rel (0) target = $region25
    $region24: #{tpu_custom_call.1} parent=1 // pred_region
      %s76 = ssub.s32 64, 64
      %77 = vsyncadd [#allocation12], %s76
      %s79 = sshll.u32 [#allocation11], 4
      %s80 = int_to_ptr.vmem [resolvable:$true] %s79
      %82 = dma.hbm_to_vmem [thread:$0]  %s5, 64, %s80, [#allocation12]
    $region25: #{tpu_custom_call.1} parent=1 // pred_fallthru
      _
    // Predicated region
    $region26: #{tpu_custom_call.1} parent=1 // pred_check
      _
    $region27: #{tpu_custom_call.1} parent=1 // pred_check_branch
      %84 = sbr.rel (0) target = $region29
    $region28: #{tpu_custom_call.1} parent=1 // pred_region
      %s86 = ssub.s32 16, 16
      %87 = vsyncadd [#allocation12], %s86
      %s89 = sshll.u32 [#allocation13], 4
      %s90 = int_to_ptr.vmem [resolvable:$true] %s89
      %92 = dma.hbm_to_vmem [thread:$0]  %s6, 16, %s90, [#allocation12]
    $region29: #{tpu_custom_call.1} parent=1 // pred_fallthru
      _
    // Predicated region
    $region30: #{tpu_custom_call.1} parent=1 // pred_check
      _
    $region31: #{tpu_custom_call.1} parent=1 // pred_check_branch
      %94 = sbr.rel (0) target = $region33
    $region32: #{tpu_custom_call.1} parent=1 // pred_region
      %s96 = ssub.s32 64, 64
      %97 = vsyncadd [#allocation15], %s96
      %s99 = sshll.u32 [#allocation14], 4
      %s100 = int_to_ptr.vmem [resolvable:$true] %s99
      %102 = dma.hbm_to_vmem [thread:$0]  %s7, 64, %s100, [#allocation15]
    $region33: #{tpu_custom_call.1} parent=1 // pred_fallthru
      _
    // Predicated region
    $region34: #{tpu_custom_call.1} parent=1 // pred_check
      _
    $region35: #{tpu_custom_call.1} parent=1 // pred_check_branch
      %104 = sbr.rel (0) target = $region37
    $region36: #{tpu_custom_call.1} parent=1 // pred_region
      %105 = dma.done [#allocation3], 256
    $region37: #{tpu_custom_call.1} parent=1 // pred_fallthru
      _
    // Predicated region
    $region38: #{tpu_custom_call.1} parent=1 // pred_check
      _
    $region39: #{tpu_custom_call.1} parent=1 // pred_check_branch
      %107 = sbr.rel (0) target = $region41
    $region40: #{tpu_custom_call.1} parent=1 // pred_region
      %108 = dma.done [#allocation6], 256
    $region41: #{tpu_custom_call.1} parent=1 // pred_fallthru
      _
    // Predicated region
    $region42: #{tpu_custom_call.1} parent=1 // pred_check
      _
    $region43: #{tpu_custom_call.1} parent=1 // pred_check_branch
      %110 = sbr.rel (0) target = $region45
    $region44: #{tpu_custom_call.1} parent=1 // pred_region
      %111 = dma.done [#allocation6], 64
    $region45: #{tpu_custom_call.1} parent=1 // pred_fallthru
      _
    // Predicated region
    $region46: #{tpu_custom_call.1} parent=1 // pred_check
      _
    $region47: #{tpu_custom_call.1} parent=1 // pred_check_branch
      %113 = sbr.rel (0) target = $region49
    $region48: #{tpu_custom_call.1} parent=1 // pred_region
      %114 = dma.done [#allocation9], 64
    $region49: #{tpu_custom_call.1} parent=1 // pred_fallthru
      _
    // Predicated region
    $region50: #{tpu_custom_call.1} parent=1 // pred_check
      _
    $region51: #{tpu_custom_call.1} parent=1 // pred_check_branch
      %116 = sbr.rel (0) target = $region53
    $region52: #{tpu_custom_call.1} parent=1 // pred_region
      %117 = dma.done [#allocation9], 64
    $region53: #{tpu_custom_call.1} parent=1 // pred_fallthru
      _
    // Predicated region
    $region54: #{tpu_custom_call.1} parent=1 // pred_check
      _
    $region55: #{tpu_custom_call.1} parent=1 // pred_check_branch
      %119 = sbr.rel (0) target = $region57
    $region56: #{tpu_custom_call.1} parent=1 // pred_region
      %120 = dma.done [#allocation12], 64
    $region57: #{tpu_custom_call.1} parent=1 // pred_fallthru
      _
    // Predicated region
    $region58: #{tpu_custom_call.1} parent=1 // pred_check
      _
    $region59: #{tpu_custom_call.1} parent=1 // pred_check_branch
      %122 = sbr.rel (0) target = $region61
    $region60: #{tpu_custom_call.1} parent=1 // pred_region
      %123 = dma.done [#allocation12], 16
    $region61: #{tpu_custom_call.1} parent=1 // pred_fallthru
      _
    // Predicated region
    $region62: #{tpu_custom_call.1} parent=1 // pred_check
      _
    $region63: #{tpu_custom_call.1} parent=1 // pred_check_branch
      %125 = sbr.rel (0) target = $region65
    $region64: #{tpu_custom_call.1} parent=1 // pred_region
      %126 = dma.done [#allocation15], 64
    $region65: #{tpu_custom_call.1} parent=1 // pred_fallthru
      _
    %v127 = vld [vmem:[#allocation2] sm:$0xff]
    %v128 = vld [vmem:[#allocation2 + $0x8] sm:$0xf]
    %v129 = vld [vmem:[#allocation5] sm:$0xff]
    %v130 = vld [vmem:[#allocation5 + $0x8] sm:$0xf]
    %v131 = vsub.f32 %v127, %v129
    %v132 = vsub.f32 %v128, %v130
    %v133 = vlaneseq
    %v134 = vshrl.u32 %v133, 7
    %v135 = vadd.s32 %v134, 8
    %s136 = smul.u32 0, 12
    %v137 = vstv %s136
    %v138 = vadd.s32 %v134, %v137
    %v139 = vadd.s32 %v135, %v137
    %vm140 = vcmp.lt.s32.totalorder %v138, 12
    %vm141 = vcmp.lt.s32.totalorder %v139, 12
    %v142 = vsel %vm140, %v131, 0.0
    %v143 = vsel %vm141, %v132, 0.0
    %v144 = vand.u32 2147483647, %v142
    %v145 = vand.u32 2147483647, %v143
    %146 = vadd.xlane.f32.xlu0 %v144
    %v147 = vpop.xlane.xlu0 %146
    %vm148 = vcmask 1043456
    %v149 = vsel %vm148, %v145, 0.0
    %150 = vadd.xlane.f32.xlu0 %v149
    %v151 = vpop.xlane.xlu0 %150
    %v152 = vsel %vm148, %v151, 0.0
    %v153 = vadd.f32 %v147, %v152
    %v154 = vrot.slane %v153, 4
    %v155 = vadd.f32 %v153, %v154
    %v156 = vrot.slane %v155, 2
    %v157 = vadd.f32 %v155, %v156
    %v158 = vrot.slane %v157, 1
    %v159 = vadd.f32 %v157, %v158
    %v160 = vmul.f32 %v159, 0.0006510417
    %v161 = vmul.f32 %v142, %v142
    %v162 = vmul.f32 %v143, %v143
    %163 = vadd.xlane.f32.xlu0 %v161
    %v164 = vpop.xlane.xlu0 %163
    %v165 = vsel %vm148, %v162, 0.0
    %166 = vadd.xlane.f32.xlu0 %v165
    %v167 = vpop.xlane.xlu0 %166
    %v168 = vsel %vm148, %v167, 0.0
    %v169 = vadd.f32 %v164, %v168
    %v170 = vrot.slane %v169, 4
    %v171 = vadd.f32 %v169, %v170
    %v172 = vrot.slane %v171, 2
    %v173 = vadd.f32 %v171, %v172
    %v174 = vrot.slane %v173, 1
    %v175 = vadd.f32 %v173, %v174
    %v176 = vmul.f32 %v175, 0.0006510417
    %v177 = vld [vmem:[#allocation7] sm:$0xf]
    %v178 = vld [vmem:[#allocation8] sm:$0xf]
    %v179 = vsub.f32 %v177, %v178
    %s180 = smul.u32 0, 4
    %v181 = vstv %s180
    %v182 = vadd.s32 %v134, %v181
    %vm183 = vcmp.lt.s32.totalorder %v182, 4
    %v184 = vsel %vm183, %v179, 0.0
    %v185 = vand.u32 2147483647, %v184
    %v186 = vsel %vm148, %v185, 0.0
    %187 = vadd.xlane.f32.xlu0 %v186
    %v188 = vpop.xlane.xlu0 %187
    %v189 = vsel %vm148, %v188, 0.0
    %v190 = vrot.slane %v189, 4
    %v191 = vadd.f32 %v189, %v190
    %v192 = vrot.slane %v191, 2
    %v193 = vadd.f32 %v191, %v192
    %v194 = vrot.slane %v193, 1
    %v195 = vadd.f32 %v193, %v194
    %v196 = vmul.f32 %v195, 0.001953125
    %v197 = vld [vmem:[#allocation10] sm:$0xf]
    %v198 = vld [vmem:[#allocation11] sm:$0xf]
    %v199 = vsub.f32 %v197, %v198
    %vm200 = vcmp.gt.f32.partialorder %v197, %v198
    %v201 = vmul.f32 %v199, %v199
    %v202 = vsel %vm200, %v201, 0.0
    %v203 = vsel %vm183, %v202, 0.0
    %v204 = vsel %vm148, %v203, 0.0
    %205 = vadd.xlane.f32.xlu0 %v204
    %v206 = vpop.xlane.xlu0 %205
    %v207 = vsel %vm148, %v206, 0.0
    %v208 = vrot.slane %v207, 4
    %v209 = vadd.f32 %v207, %v208
    %v210 = vrot.slane %v209, 2
    %v211 = vadd.f32 %v209, %v210
    %v212 = vrot.slane %v211, 1
    %v213 = vadd.f32 %v211, %v212
    %v214 = vmul.f32 %v213, 0.001953125
    %v215 = vlaneseq
    %v216 = vand.u32 %v215, 127
    %vm217 = vcmp.eq.s32.totalorder %v216, 0
    %v218 = vsel %vm217, %v160, 0.0
    %vm219 = vcmp.eq.s32.totalorder %v216, 1
    %v220 = vsel %vm219, %v176, 0.0
    %v221 = vadd.f32 %v218, %v220
    %vm222 = vcmp.eq.s32.totalorder %v216, 2
    %v223 = vsel %vm222, %v196, 0.0
    %v224 = vadd.f32 %v221, %v223
    %vm225 = vcmp.eq.s32.totalorder %v216, 3
    %v226 = vsel %vm225, %v214, 0.0
    %v227 = vadd.f32 %v224, %v226
    %p228 = scmp.eq.s32.totalorder 0, 0
    // Predicated region
    $region66: #{tpu_custom_call.1} parent=1 // pred_check
      %p229 = pneg %p228
    $region67: #{tpu_custom_call.1} parent=1 // pred_check_branch
      %231 = sbr.rel (%p229) target = $region69
    $region68: #{tpu_custom_call.1} parent=1 // pred_region
      %v232 = vld [vmem:[#allocation13] sm:$0x1]
      %v233 = vmul.f32 %v232, %v232
      %vm234 = vcmask 1040384
      %v235 = vsel %vm234, %v233, 0.0
      %236 = vadd.xlane.f32.xlu0 %v235
      %v237 = vpop.xlane.xlu0 %236
      %v238 = vadd.f32 %v237, 0.0
      %v239 = vmul.f32 %v238, 0.0078125
      %v240 = vld [vmem:[#allocation14] sm:$0x7]
      %v241 = vmul.f32 %v240, %v240
      %vm242 = vcmask 1042432
      %v243 = vsel %vm242, %v241, 0.0
      %v244 = vrot.slane %v243, 4
      %v245 = vadd.f32 %v243, %v244
      %v246 = vrot.slane %v245, 2
      %v247 = vadd.f32 %v245, %v246
      %v248 = vrot.slane %v247, 1
      %v249 = vadd.f32 %v247, %v248
      %v250 = vrsqrt.pop %v249
      %v251 = vmul.f32 %v249, %v250
      %vm252 = vcmp.eq.f32.partialorder %v249, inf
      %v253 = vsel %vm252, %v249, %v251
      %vm254 = vcmp.eq.f32.partialorder %v249, 0.0
      %v255 = vand.u32 %v249, 2147483648
      %v256 = vsel %vm254, %v255, %v253
      %v257 = vsub.f32 %v256, 1.0
      %v258 = vmul.f32 %v257, %v257
      %259 = vadd.xlane.f32.xlu0 %v258
      %v260 = vpop.xlane.xlu0 %259
      %v261 = vmul.f32 %v260, 0.0078125
      %vm262 = vcmp.eq.s32.totalorder %v216, 4
      %v263 = vsel %vm262, %v239, 0.0
      %v264 = vadd.f32 %v227, %v263
      %vm265 = vcmp.eq.s32.totalorder %v216, 5
      %v266 = vsel %vm265, %v261, 0.0
      %v267 = vadd.f32 %v264, %v266
      %268 = vst [vmem:[#allocation16] sm:$0x1] %v267
    $region69: #{tpu_custom_call.1} parent=1 // pred_fallthru
      _
    %p269 = scmp.gt.s32.totalorder 0, 0
    // Predicated region
    $region70: #{tpu_custom_call.1} parent=1 // pred_check
      %p270 = pneg %p269
    $region71: #{tpu_custom_call.1} parent=1 // pred_check_branch
      %272 = sbr.rel (%p270) target = $region73
    $region72: #{tpu_custom_call.1} parent=1 // pred_region
      %v273 = vld [vmem:[#allocation16] sm:$0x1]
      %v274 = vadd.f32 %v273, %v227
      %275 = vst [vmem:[#allocation16] sm:$0x1] %v274
    $region73: #{tpu_custom_call.1} parent=1 // pred_fallthru
      _
    // Predicated region
    $region74: #{tpu_custom_call.1} parent=1 // pred_check
      _
    $region75: #{tpu_custom_call.1} parent=1 // pred_check_branch
      %277 = sbr.rel (0) target = $region77
    $region76: #{tpu_custom_call.1} parent=1 // pred_region
      %s279 = ssub.s32 16, 16
      %280 = vsyncadd [#allocation4], %s279
      %s282 = sshll.u32 [#allocation16], 4
      %s283 = int_to_ptr.vmem [resolvable:$true] %s282
      %285 = dma.vmem_to_hbm [thread:$0]  %s283, 16, %s8, [#allocation4]
    $region77: #{tpu_custom_call.1} parent=1 // pred_fallthru
      _
    // Predicated region
    $region78: #{tpu_custom_call.1} parent=1 // pred_check
      _
    $region79: #{tpu_custom_call.1} parent=1 // pred_check_branch
      %287 = sbr.rel (0) target = $region81
    $region80: #{tpu_custom_call.1} parent=1 // pred_region
      %288 = dma.done [#allocation4], 16
    $region81: #{tpu_custom_call.1} parent=1 // pred_fallthru
      _
    %289 = vsyncpa [#allocation3], 1
    %290 = vsyncpa [#allocation6], 1
    %291 = vsyncpa [#allocation9], 1
    %292 = vsyncpa [#allocation12], 1
    %293 = vsyncpa [#allocation15], 1
    %294 = vsyncpa [#allocation4], 1

</llo_original>
